<compile_context>
chip_gen: v5e
topology: v5e:2x2
jax: 0.10.0
libtpu: 0.0.40
codegen_flags: <defaults>
</compile_context>

<pallas_src>
import jax
import jax.numpy as jnp
from jax import lax
from jax.experimental import pallas as pl
from jax.experimental.pallas import tpu as pltpu


# ----------------------------------------------------------------------------
# Small helpers.
# ----------------------------------------------------------------------------
def _sigmoid(x):
    # Explicit formula (exp + divide) so kernel and reference match exactly.
    return 1.0 / (1.0 + jnp.exp(-x))


def _vmem_capacity_bytes():
    """Per-core VMEM capacity; conservative fallback if the query fails."""
    try:
        info = pltpu.get_tpu_info()
        cap = getattr(info, "vmem_capacity_bytes", None)
        if cap:
            return int(cap)
    except Exception:
        pass
    return 64 << 20  # v7x per-core VMEM (smallest of v5e/v6e/v7x)


def _compiler_params(dims, est_bytes):
    """Explicit VMEM limit so the pipeline is never silently collapsed."""
    cap = _vmem_capacity_bytes()
    limit = int(min(cap * 9 // 10, max(32 << 20, 2 * est_bytes + (8 << 20))))
    return pltpu.CompilerParams(dimension_semantics=dims,
                                vmem_limit_bytes=limit)


def _pick_batch_tile(batch, max_tb=256):
    """Batch tile (M dim of the serial h@W_hh matmul).

    * capped at ~256 rows (v6e/v7x 256-row MXU; also fine on v5e),
    * guaranteed to give >= 2 grid steps when batch >= 16 so the 'parallel'
      batch axis can be split across v7x's two TensorCores,
    * a multiple of 8 sublanes whenever it is a strict sub-tile of batch.
    """
    if batch < 16:
        return batch
    target = min(max_tb, max(8, (batch // 2) - ((batch // 2) % 8)))
    tb = target
    while tb >= 8:
        if batch % tb == 0:
            return tb
        tb -= 8
    return batch


def _recurrence_vmem_bytes(ts, tb, H, out_dim, out_itemsize, with_fc):
    """Estimated VMEM footprint of the recurrence kernel (double buffering,
    resident W_hh, h0/c0 blocks, fc weights and all scratch included)."""
    xg_blk = 4 * ts * tb * H * 2                 # bf16 gate block
    out_blk = ts * tb * out_dim * out_itemsize   # per-chunk output block
    whh = 4 * H * H * 2                          # bf16 recurrent weights
    hc_in = 2 * tb * H * 4                       # h0 / c0 blocks (f32)
    fc_par = (H * out_dim * 2 + out_dim * 4) if with_fc else 0
    scratch = 2 * tb * H * 4 + (ts * tb * H * 2 if with_fc else 0)
    return 2 * (xg_blk + out_blk + whh + hc_in + fc_par) + scratch


def _pick_time_chunk(seq, tb, H, out_dim, out_itemsize, with_fc, max_ts=128):
    """Timesteps per grid step: as large as the VMEM budget allows (amortizes
    the ~0.35us per-grid-step overhead) while keeping the double-buffered
    blocks + weights + scratch within ~1/3 of the detected VMEM capacity."""
    budget = _vmem_capacity_bytes() // 3
    ts = max(1, min(seq, max_ts))
    while ts > 1 and _recurrence_vmem_bytes(
            ts, tb, H, out_dim, out_itemsize, with_fc) > budget:
        ts -= 1
    while seq % ts:
        ts -= 1
    return ts


# ----------------------------------------------------------------------------
# Kernel 1: hoisted, gate-tiled input projection
#   xg[g] = x @ W_ih[g]^T + (b_ih[g] + b_hh[g])        g in {i, f, g, o}
# One MXU-row-filling matmul per (row-tile, gate); bf16 operands, f32 accum.
# ----------------------------------------------------------------------------
def _in_proj_kernel(x_ref, w_ref, b_ref, o_ref):
    y = jnp.dot(x_ref[...], w_ref[...], preferred_element_type=jnp.float32)
    o_ref[...] = (y + b_ref[...]).astype(o_ref.dtype)


def input_projection(x_flat, w_ih_t, b, tm=512):
    """x_flat: (M, K) bf16; w_ih_t: (4, K, H) bf16; b: (4, 1, H) f32.
    Returns xg: (4, M, H) bf16."""
    M, K = x_flat.shape
    G, _, H = w_ih_t.shape
    tm = min(tm, M)
    if tm != M:
        tm = max(8, tm - (tm % 8))
    grid = (pl.cdiv(M, tm), G)
    est = 2 * (tm * K * 2 + K * H * 2 + H * 4 + tm * H * 2)
    return pl.pallas_call(
        _in_proj_kernel,
        out_shape=jax.ShapeDtypeStruct((G, M, H), jnp.bfloat16),
        grid_spec=pltpu.PrefetchScalarGridSpec(
            num_scalar_prefetch=0,
            grid=grid,
            in_specs=[
                pl.BlockSpec((tm, K), lambda i, g: (i, 0)),
                pl.BlockSpec((None, K, H), lambda i, g: (g, 0, 0)),
                pl.BlockSpec((None, 1, H), lambda i, g: (g, 0, 0)),
            ],
            out_specs=pl.BlockSpec((None, tm, H), lambda i, g: (g, i, 0)),
        ),
        compiler_params=_compiler_params(("parallel", "arbitrary"), est),
    )(x_flat, w_ih_t, b)


# ----------------------------------------------------------------------------
# Kernel 2: chunked LSTM recurrence with per-gate (H, H) matmuls.
# Grid = (batch_tiles, seq_chunks); a fori_loop runs the timesteps of a chunk
# with h/c carried in vregs (f32); VMEM scratch is touched only at chunk
# boundaries.  Gate order follows PyTorch: [i, f, g, o].
# ----------------------------------------------------------------------------
def _lstm_recurrence(xg_ref, whh_ref, h0_ref, c0_ref, hn_ref, cn_ref,
                     h_scr, c_scr, emit):
    chunk = pl.program_id(1)

    @pl.when(chunk == 0)
    def _():
        h_scr[...] = h0_ref[...].astype(jnp.float32)
        c_scr[...] = c0_ref[...].astype(jnp.float32)

    ts = xg_ref.shape[1]
    compute_dt = whh_ref.dtype  # bf16 MXU operands, f32 accumulation

    def step(t, carry):
        h, c = carry
        hb = h.astype(compute_dt)
        # Four per-gate (tb,H)@(H,H) matmuls; each gate preact is an exact
        # lane tile, so the EUP activation of gate k overlaps the MXU push of
        # gate k+1 and there is never a (tb, 4H) f32 live block.
        pre = [xg_ref[g, t].astype(jnp.float32) +
               jnp.dot(hb, whh_ref[g], preferred_element_type=jnp.float32)
               for g in range(4)]
        i_g = _sigmoid(pre[0])
        f_g = _sigmoid(pre[1])
        g_g = jnp.tanh(pre[2])
        o_g = _sigmoid(pre[3])
        c_new = f_g * c + i_g * g_g
        h_new = o_g * jnp.tanh(c_new)
        emit(t, h_new)
        return h_new, c_new

    # h/c live in vregs across the chunk; spill to VMEM only at the boundary.
    h_fin, c_fin = lax.fori_loop(0, ts, step, (h_scr[...], c_scr[...]),
                                 unroll=min(int(ts), 8))
    h_scr[...] = h_fin
    c_scr[...] = c_fin

    @pl.when(chunk == pl.num_programs(1) - 1)
    def _():
        hn_ref[...] = h_fin.astype(hn_ref.dtype)
        cn_ref[...] = c_fin.astype(cn_ref.dtype)


def _lstm_chunk_kernel(xg_ref, whh_ref, h0_ref, c0_ref,
                       out_ref, hn_ref, cn_ref, h_scr, c_scr):
    # Intermediate layer: per-step hidden state goes straight to the (bf16)
    # output block.
    def emit(t, h_new):
        out_ref[t] = h_new.astype(out_ref.dtype)

    _lstm_recurrence(xg_ref, whh_ref, h0_ref, c0_ref, hn_ref, cn_ref,
                     h_scr, c_scr, emit)


def _lstm_chunk_fc_kernel(xg_ref, whh_ref, h0_ref, c0_ref, fcw_ref, fcb_ref,
                          out_ref, hn_ref, cn_ref, h_scr, c_scr, hbuf):
    # Last layer: ReLU(h_t) is stashed (bf16) into VMEM during the recurrence;
    # the fc matmuls run AFTER the fori_loop, so they sit fully off the serial
    # carry path and the MXU never re-stages W_hh / fc weights per timestep.
    def emit(t, h_new):
        hbuf[t] = jnp.maximum(h_new, 0.0).astype(hbuf.dtype)

    _lstm_recurrence(xg_ref, whh_ref, h0_ref, c0_ref, hn_ref, cn_ref,
                     h_scr, c_scr, emit)

    fcw = fcw_ref[...]
    fcb = fcb_ref[...]
    ts = hbuf.shape[0]

    def fc_step(t, carry):
        y = jnp.dot(hbuf[t], fcw, preferred_element_type=jnp.float32) + fcb
        out_ref[t] = y.astype(out_ref.dtype)
        return carry

    lax.fori_loop(0, ts, fc_step, 0, unroll=min(int(ts), 8))


def lstm_layer(x_tbd, w_ih_t, w_hh_t, b, h0, c0, fc=None):
    """One LSTM layer (optionally with fused ReLU+fc).

    x_tbd: (seq, batch, in_dim) time-major bf16.  fc: None or (fc_w_t, fc_b).
    Returns (out_seq, h_n, c_n); out_seq is bf16 (hidden states) for
    intermediate layers, f32 fc output for the last layer.
    """
    seq, batch, in_dim = x_tbd.shape
    H = h0.shape[-1]

    # --- hoisted, gate-tiled input projection (bias folded in) --------------
    xg = input_projection(x_tbd.reshape(seq * batch, in_dim), w_ih_t, b)
    xg = xg.reshape(4, seq, batch, H)  # free reshape

    tb = _pick_batch_tile(batch)
    if fc is None:
        out_dim, out_dtype, kernel, with_fc = H, jnp.bfloat16, \
            _lstm_chunk_kernel, False
    else:
        fc_w_t, fc_b = fc
        out_dim, out_dtype, kernel, with_fc = fc_w_t.shape[-1], jnp.float32, \
            _lstm_chunk_fc_kernel, True

    out_isz = jnp.dtype(out_dtype).itemsize
    ts = _pick_time_chunk(seq, tb, H, out_dim, out_isz, with_fc)
    grid = (batch // tb, seq // ts)

    in_specs = [
        pl.BlockSpec((4, ts, tb, H), lambda bb, tc: (0, tc, bb, 0)),
        pl.BlockSpec((4, H, H), lambda bb, tc: (0, 0, 0)),
        pl.BlockSpec((tb, H), lambda bb, tc: (bb, 0)),
        pl.BlockSpec((tb, H), lambda bb, tc: (bb, 0)),
    ]
    args = [xg, w_hh_t, h0, c0]
    scratch = [
        pltpu.VMEM((tb, H), jnp.float32),  # h carried across chunks
        pltpu.VMEM((tb, H), jnp.float32),  # c carried across chunks
    ]
    if with_fc:
        in_specs += [
            pl.BlockSpec((H, out_dim), lambda bb, tc: (0, 0)),
            pl.BlockSpec((1, out_dim), lambda bb, tc: (0, 0)),
        ]
        args += [fc_w_t, fc_b]
        scratch += [pltpu.VMEM((ts, tb, H), jnp.bfloat16)]  # ReLU(h_t) stash

    out_shapes = (
        jax.ShapeDtypeStruct((seq, batch, out_dim), out_dtype),
        jax.ShapeDtypeStruct((batch, H), jnp.float32),   # h_n
        jax.ShapeDtypeStruct((batch, H), jnp.float32),   # c_n
    )
    out_specs = [
        pl.BlockSpec((ts, tb, out_dim), lambda bb, tc: (tc, bb, 0)),
        pl.BlockSpec((tb, H), lambda bb, tc: (bb, 0)),
        pl.BlockSpec((tb, H), lambda bb, tc: (bb, 0)),
    ]

    est = _recurrence_vmem_bytes(ts, tb, H, out_dim, out_isz, with_fc)
    return pl.pallas_call(
        kernel,
        out_shape=out_shapes,
        grid_spec=pltpu.PrefetchScalarGridSpec(
            num_scalar_prefetch=0,
            grid=grid,
            in_specs=in_specs,
            out_specs=out_specs,
            scratch_shapes=scratch,
        ),
        # batch tiles parallel (megacore), seq chunks strictly sequential.
        compiler_params=_compiler_params(("parallel", "arbitrary"), est),
    )(*args)


# ----------------------------------------------------------------------------
# Full LSTMNet forward (glue in plain JAX, hot path in Pallas).
# ----------------------------------------------------------------------------
def lstm_net_forward(x, h, params):
    """x: (batch, seq, input_size) f32; h = (h0, c0), each (layers, batch, H)."""
    h0_all, c0_all = h
    num_layers = h0_all.shape[0]

    # time-major + bf16 activation stream for the MXU / HBM traffic
    layer_in = jnp.transpose(x, (1, 0, 2)).astype(jnp.bfloat16)
    hn_list, cn_list = [], []
    for l in range(num_layers):
        w_ih_t, w_hh_t, b = params["layers"][l]
        fc = (params["fc_w_t"], params["fc_b"]) if l == num_layers - 1 else None
        out_seq, h_n, c_n = lstm_layer(layer_in, w_ih_t, w_hh_t, b,
                                       h0_all[l], c0_all[l], fc=fc)
        hn_list.append(h_n)
        cn_list.append(c_n)
        layer_in = out_seq

    out = jnp.transpose(layer_in, (1, 0, 2))  # (batch, seq, output_size) f32
    return out, (jnp.stack(hn_list), jnp.stack(cn_list))


# ----------------------------------------------------------------------------
# Deterministic parameter construction (PyTorch-style uniform(-1/sqrt(H), ..)),
# pre-arranged for the kernels: per-gate transposed bf16 weights, f32 biases.
# ----------------------------------------------------------------------------
def init_params(key, input_size, hidden_size, output_size, num_layers):
    H = hidden_size
    k = 1.0 / float(H) ** 0.5
    layers = []
    for l in range(num_layers):
        in_dim = input_size if l == 0 else H
        key, k1, k2, k3, k4 = jax.random.split(key, 5)
        w_ih = jax.random.uniform(k1, (4 * H, in_dim), jnp.float32, -k, k)
        w_hh = jax.random.uniform(k2, (4 * H, H), jnp.float32, -k, k)
        b_ih = jax.random.uniform(k3, (4 * H,), jnp.float32, -k, k)
        b_hh = jax.random.uniform(k4, (4 * H,), jnp.float32, -k, k)
        w_ih_t = jnp.transpose(w_ih.reshape(4, H, in_dim), (0, 2, 1))
        w_hh_t = jnp.transpose(w_hh.reshape(4, H, H), (0, 2, 1))
        layers.append((w_ih_t.astype(jnp.bfloat16),
                       w_hh_t.astype(jnp.bfloat16),
                       (b_ih + b_hh).reshape(4, 1, H)))  # bias stays f32
    key, k5, k6 = jax.random.split(key, 3)
    fc_w = jax.random.uniform(k5, (output_size, H), jnp.float32, -k, k)
    fc_b = jax.random.uniform(k6, (output_size,), jnp.float32, -k, k)
    return {"layers": layers,
            "fc_w_t": fc_w.T.astype(jnp.bfloat16),
            "fc_b": fc_b.reshape(1, -1)}


# ----------------------------------------------------------------------------
# Pure-JAX reference mirroring the kernel numerics (bf16 matmul operands and
# bf16 activation storage, f32 accumulation and f32 gate math), so the
# tolerance check validates the Pallas plumbing without f32-vs-bf16 slack.
# ----------------------------------------------------------------------------
def reference_forward(x, h, params):
    h0_all, c0_all = h
    num_layers = h0_all.shape[0]
    layer_in = x.astype(jnp.bfloat16)  # (batch, seq, in)
    hn, cn = [], []
    for l in range(num_layers):
        w_ih_t, w_hh_t, b = params["layers"][l]
        B, S, _ = layer_in.shape
        xg = jnp.einsum("bsk,gkh->gbsh", layer_in, w_ih_t,
                        preferred_element_type=jnp.float32)
        xg = (xg + b[:, None]).astype(jnp.bfloat16)
        hs, cs = h0_all[l], c0_all[l]
        outs = []
        for t in range(S):
            hb = hs.astype(jnp.bfloat16)
            pre = xg[:, :, t, :].astype(jnp.float32) + jnp.einsum(
                "bh,ghk->gbk", hb, w_hh_t, preferred_element_type=jnp.float32)
            i = _sigmoid(pre[0])
            f = _sigmoid(pre[1])
            g = jnp.tanh(pre[2])
            o = _sigmoid(pre[3])
            cs = f * cs + i * g
            hs = o * jnp.tanh(cs)
            outs.append(hs)
        hn.append(hs)
        cn.append(cs)
        layer_in = jnp.stack(outs, axis=1).astype(jnp.bfloat16)
    relu_h = jnp.maximum(layer_in, 0)
    out = jnp.einsum("bsh,ho->bso", relu_h, params["fc_w_t"],
                     preferred_element_type=jnp.float32) + params["fc_b"]
    return out, (jnp.stack(hn), jnp.stack(cn))


if __name__ == "__main__":
    input_size, hidden_size, output_size, num_layers = 16, 32, 4, 2
    batch, seq = 2, 8

    key = jax.random.PRNGKey(0)
    key, kx = jax.random.split(key)
    params = init_params(key, input_size, hidden_size, output_size, num_layers)

    x = jax.random.normal(kx, (batch, seq, input_size), jnp.float32)
    # init_hidden(batch_size): zeros of shape (num_layers, batch, hidden)
    h0 = jnp.zeros((num_layers, batch, hidden_size), jnp.float32)
    c0 = jnp.zeros((num_layers, batch, hidden_size), jnp.float32)

    out, (h_n, c_n) = lstm_net_forward(x, (h0, c0), params)
    out = jax.block_until_ready(out)
    h_n = jax.block_until_ready(h_n)
    c_n = jax.block_until_ready(c_n)

    # correctness check vs the bf16-mirrored pure-JAX reference
    ref_out, (ref_hn, ref_cn) = reference_forward(x, (h0, c0), params)
    assert out.shape == (batch, seq, output_size)
    assert h_n.shape == (num_layers, batch, hidden_size)
    assert c_n.shape == (num_layers, batch, hidden_size)
    assert float(jnp.max(jnp.abs(out - ref_out))) < 5e-3
    assert float(jnp.max(jnp.abs(h_n - ref_hn))) < 5e-3
    assert float(jnp.max(jnp.abs(c_n - ref_cn))) < 5e-3

    print("KERNEL_OK")
</pallas_src>

<mosaic_0001>
module attributes {stable_mosaic.version = 11 : i64} {
  func.func @_in_proj_kernel(%arg0: i32, %arg1: i32, %arg2: memref<16x16xbf16, #tpu.memory_space<vmem>>, %arg3: memref<1x16x32xbf16, #tpu.memory_space<vmem>>, %arg4: memref<1x1x32xf32, #tpu.memory_space<vmem>>, %arg5: memref<1x16x32xbf16, #tpu.memory_space<vmem>>) attributes {dimension_semantics = [#tpu.dimension_semantics<parallel>, #tpu.dimension_semantics<arbitrary>], iteration_bounds = array<i64: 1, 4>, scalar_prefetch = 0 : i64, scratch_operands = 0 : i64, tpu.core_type = #tpu.core_type<tc>, window_params = [{transform_indices = @transform_0, window_bounds = array<i64: 16, 16>}, {transform_indices = @transform_1, window_bounds = array<i64: 1, 16, 32>}, {transform_indices = @transform_2, window_bounds = array<i64: 1, 1, 32>}, {transform_indices = @transform_3, window_bounds = array<i64: 1, 16, 32>}]} {
    %c0 = arith.constant 0 : index
    %c0_0 = arith.constant 0 : index
    %0 = vector.load %arg2[%c0, %c0_0] : memref<16x16xbf16, #tpu.memory_space<vmem>>, vector<16x16xbf16>
    %c0_1 = arith.constant 0 : index
    %c0_2 = arith.constant 0 : index
    %c0_3 = arith.constant 0 : index
    %1 = vector.load %arg3[%c0_1, %c0_2, %c0_3] : memref<1x16x32xbf16, #tpu.memory_space<vmem>>, vector<1x16x32xbf16>
    %2 = vector.shape_cast %1 : vector<1x16x32xbf16> to vector<16x32xbf16>
    %cst = arith.constant dense<0.000000e+00> : vector<16x32xf32>
    %3 = tpu.matmul %0, %2, %cst {dimension_numbers = #tpu.dot_dimension_numbers<[1], [0], [0], [1], [0, 0, 1, 1], [], []>} : vector<16x16xbf16>, vector<16x32xbf16>, vector<16x32xf32> -> vector<16x32xf32>
    %c0_4 = arith.constant 0 : index
    %c0_5 = arith.constant 0 : index
    %c0_6 = arith.constant 0 : index
    %4 = vector.load %arg4[%c0_4, %c0_5, %c0_6] : memref<1x1x32xf32, #tpu.memory_space<vmem>>, vector<1x1x32xf32>
    %5 = vector.shape_cast %4 : vector<1x1x32xf32> to vector<1x32xf32>
    %6 = vector.broadcast %5 : vector<1x32xf32> to vector<16x32xf32>
    %7 = arith.addf %3, %6 : vector<16x32xf32>
    %8 = arith.truncf %7 : vector<16x32xf32> to vector<16x32xbf16>
    %c0_7 = arith.constant 0 : index
    %c0_8 = arith.constant 0 : index
    %c0_9 = arith.constant 0 : index
    %9 = vector.load %arg5[%c0_7, %c0_8, %c0_9] : memref<1x16x32xbf16, #tpu.memory_space<vmem>>, vector<1x16x32xbf16>
    %10 = vector.shape_cast %9 : vector<1x16x32xbf16> to vector<16x32xbf16>
    %11 = vector.shape_cast %8 : vector<16x32xbf16> to vector<1x16x32xbf16>
    tpu.vector_store %arg5[%c0_7, %c0_8, %c0_9], %11 {strides = array<i32>} : memref<1x16x32xbf16, #tpu.memory_space<vmem>>, vector<1x16x32xbf16>,
    return
  }
  func.func @transform_0(%arg0: i32, %arg1: i32) -> (i32, i32) {
    %c0_i32 = arith.constant 0 : i32
    %c0_i32_0 = arith.constant 0 : i32
    return %arg0, %c0_i32 : i32, i32
  }
  func.func @transform_1(%arg0: i32, %arg1: i32) -> (i32, i32, i32) {
    %c0_i32 = arith.constant 0 : i32
    %c0_i32_0 = arith.constant 0 : i32
    %c0_i32_1 = arith.constant 0 : i32
    return %arg1, %c0_i32, %c0_i32_0 : i32, i32, i32
  }
  func.func @transform_2(%arg0: i32, %arg1: i32) -> (i32, i32, i32) {
    %c0_i32 = arith.constant 0 : i32
    %c0_i32_0 = arith.constant 0 : i32
    %c0_i32_1 = arith.constant 0 : i32
    return %arg1, %c0_i32, %c0_i32_0 : i32, i32, i32
  }
  func.func @transform_3(%arg0: i32, %arg1: i32) -> (i32, i32, i32) {
    %c0_i32 = arith.constant 0 : i32
    %c0_i32_0 = arith.constant 0 : i32
    return %arg1, %arg0, %c0_i32 : i32, i32, i32
  }
}

</mosaic_0001>

<llo_original>
// kernel: tpu_custom_call.1
$region0: #{tpu_custom_call.1}
  #allocation0 [shape = 'u32[]', space=smem, size = 0x4, offset = 0x4, fixed_abs, tag = 'smem constant byte address 0x4 - core index']
  #allocation1 [shape = 'u32[72,128]{1,0:T(1,128)}', space=vmem, size = 0x9000, scoped, tag = 'internal scratch']
  %s0 = inlined_call_operand.hbm [shape: bf16[16,16], index: 0, kind: input, shape index: {}]
  %s1 = inlined_call_operand.hbm [shape: bf16[4,16,32], index: 1, kind: input, shape index: {}]
  %s2 = inlined_call_operand.hbm [shape: f32[4,1,32], index: 2, kind: input, shape index: {}]
  %s3 = inlined_call_operand.hbm [shape: bf16[4,16,32], index: 3, kind: output, shape index: {}]
  %s4 = sld [smem:[#allocation0]]
  $region57: #{tpu_custom_call.1} parent=0
    _
  %s6 = ssub.s32 1, %s4
  %s7 = scalar_select 0, %s6, %s4
  $region1: #{tpu_custom_call.1} parent=0
    #allocation2 [shape = 'u8[4096]{0}', space=vmem, size = 0x1000, scoped, tag = 'input window, operand 0, single buffered']
    #allocation3 [shape = 's32[2]{0}', space=sflag, size = 0x8, scoped, tag = 'scoped memory for tpu_custom_call.1']
    #allocation4 [shape = 's32[2]{0}', space=sflag, size = 0x8, scoped, tag = 'scoped memory for tpu_custom_call.1']
    #allocation5 [shape = 'u8[8192]{0}', space=vmem, size = 0x2000, scoped, tag = 'input window, operand 1']
    #allocation6 [shape = 's32[2]{0}', space=sflag, size = 0x8, scoped, tag = 'scoped memory for tpu_custom_call.1']
    #allocation7 [shape = 'u8[1024]{0}', space=vmem, size = 0x400, scoped, tag = 'input window, operand 2']
    #allocation8 [shape = 'u8[8192]{0}', space=vmem, size = 0x2000, scoped, tag = 'output window, operand 0']
    %8 = vsyncpa [#allocation3], 0
    %9 = vsyncpa [#allocation6], 0
    %s10 = scalar_lea.sflag [#allocation6], 1
    %11 = vsyncpa %s10, 0
    %12 = vsyncpa [#allocation4], 0
    %s13 = scalar_lea.sflag [#allocation4], 1
    %14 = vsyncpa %s13, 0
    loop: start=0, step=1, limit=6
    $region2: #{tpu_custom_call.1} parent=1 // loop_pre_header
      _
    $region3: #{tpu_custom_call.1} parent=1 // loop_header
      %s16 = sphi 0, %s20
      %p17 = scmp.ge.s32.totalorder %s16, 6
      %s23 = sphi 0, %s35
      %s24 = sphi 0, %s31
      %s25 = sphi 0, %s23
      %s26 = sphi 0, %s24
      %s27 = sphi 0, %s25
      %s28 = sphi 0, %s26
      %s38 = sphi 0, %s40
      %s41 = sphi 0, %s38
      %s42 = sphi 0, %s41
      %s58 = sphi 0, %s42
      %s64 = sphi 0, %s66
      %s67 = sphi 0, %s64
      %s68 = sphi 0, %s67
      %s84 = sphi 0, %s68
      %s90 = sphi 0, %s92
      %s93 = sphi 0, %s90
      %s94 = sphi 0, %s93
      %s110 = sphi 0, %s94
      %s118 = sphi 0, %s120
      %s121 = sphi 0, %s118
      %s122 = sphi 0, %s121
      %s138 = sphi 0, %s122
    $region4: #{tpu_custom_call.1} parent=1 // loop_header_branch
      %19 = sbr.rel (%p17) target = $region8
    $region5: #{tpu_custom_call.1} parent=1 // loop_body
      %s21 = ssub.s32 %s16, 1
      %s22 = ssub.s32 %s16, 2
      %s29 = sadd.s32 1, %s24
      %p30 = scmp.ge.s32.totalorder %s29, 4
      %s31 = scalar_select %p30, 0, %s29
      %s32 = sadd.s32 1, %s23
      %s33 = scalar_select %p30, %s32, %s23
      %p34 = scmp.ge.s32.totalorder %s33, 1
      %s35 = scalar_select %p34, 0, %s33
      %s36 = ssub.s32 %s23, %s35
      %p37 = scmp.eq.s32.totalorder %s36, 0
      %s39 = sadd.s32 %s38, 1
      %s40 = scalar_select %p37, %s38, %s39
      %p43 = pneg %p37
      %p44 = scmp.eq.s32.totalorder %s16, 3
      %p45 = por %p43, %p44
      %p46 = scmp.ne.s32.totalorder %s38, %s41
      %p47 = scmp.eq.s32.totalorder %s16, 0
      %p48 = por %p46, %p47
      %p49 = scmp.ne.s32.totalorder %s38, %s41
      %p50 = scmp.eq.s32.totalorder %s21, 3
      %p51 = por %p49, %p50
      %p52 = scmp.ne.s32.totalorder %s41, %s42
      %p53 = scmp.eq.s32.totalorder %s21, 0
      %p54 = por %p52, %p53
      %p55 = scmp.ne.s32.totalorder %s41, %s42
      %p56 = scmp.eq.s32.totalorder %s22, 3
      %p57 = por %p55, %p56
      %p59 = scmp.ne.s32.totalorder %s42, %s58
      %p60 = scmp.eq.s32.totalorder %s22, 0
      %p61 = por %p59, %p60
      %s62 = ssub.s32 %s24, %s31
      %p63 = scmp.eq.s32.totalorder %s62, 0
      %s65 = sadd.s32 %s64, 1
      %s66 = scalar_select %p63, %s64, %s65
      %p69 = pneg %p63
      %p70 = scmp.eq.s32.totalorder %s16, 3
      %p71 = por %p69, %p70
      %p72 = scmp.ne.s32.totalorder %s64, %s67
      %p73 = scmp.eq.s32.totalorder %s16, 0
      %p74 = por %p72, %p73
      %p75 = scmp.ne.s32.totalorder %s64, %s67
      %p76 = scmp.eq.s32.totalorder %s21, 3
      %p77 = por %p75, %p76
      %p78 = scmp.ne.s32.totalorder %s67, %s68
      %p79 = scmp.eq.s32.totalorder %s21, 0
      %p80 = por %p78, %p79
      %p81 = scmp.ne.s32.totalorder %s67, %s68
      %p82 = scmp.eq.s32.totalorder %s22, 3
      %p83 = por %p81, %p82
      %p85 = scmp.ne.s32.totalorder %s68, %s84
      %p86 = scmp.eq.s32.totalorder %s22, 0
      %p87 = por %p85, %p86
      %s88 = ssub.s32 %s24, %s31
      %p89 = scmp.eq.s32.totalorder %s88, 0
      %s91 = sadd.s32 %s90, 1
      %s92 = scalar_select %p89, %s90, %s91
      %p95 = pneg %p89
      %p96 = scmp.eq.s32.totalorder %s16, 3
      %p97 = por %p95, %p96
      %p98 = scmp.ne.s32.totalorder %s90, %s93
      %p99 = scmp.eq.s32.totalorder %s16, 0
      %p100 = por %p98, %p99
      %p101 = scmp.ne.s32.totalorder %s90, %s93
      %p102 = scmp.eq.s32.totalorder %s21, 3
      %p103 = por %p101, %p102
      %p104 = scmp.ne.s32.totalorder %s93, %s94
      %p105 = scmp.eq.s32.totalorder %s21, 0
      %p106 = por %p104, %p105
      %p107 = scmp.ne.s32.totalorder %s93, %s94
      %p108 = scmp.eq.s32.totalorder %s22, 3
      %p109 = por %p107, %p108
      %p111 = scmp.ne.s32.totalorder %s94, %s110
      %p112 = scmp.eq.s32.totalorder %s22, 0
      %p113 = por %p111, %p112
      %s114 = ssub.s32 %s24, %s31
      %s115 = ssub.s32 %s23, %s35
      %s116 = sor.u32 %s114, %s115
      %p117 = scmp.eq.s32.totalorder %s116, 0
      %s119 = sadd.s32 %s118, 1
      %s120 = scalar_select %p117, %s118, %s119
      %p123 = pneg %p117
      %p124 = scmp.eq.s32.totalorder %s16, 3
      %p125 = por %p123, %p124
      %p126 = scmp.ne.s32.totalorder %s118, %s121
      %p127 = scmp.eq.s32.totalorder %s16, 0
      %p128 = por %p126, %p127
      %p129 = scmp.ne.s32.totalorder %s118, %s121
      %p130 = scmp.eq.s32.totalorder %s21, 3
      %p131 = por %p129, %p130
      %p132 = scmp.ne.s32.totalorder %s121, %s122
      %p133 = scmp.eq.s32.totalorder %s21, 0
      %p134 = por %p132, %p133
      %p135 = scmp.ne.s32.totalorder %s121, %s122
      %p136 = scmp.eq.s32.totalorder %s22, 3
      %p137 = por %p135, %p136
      %p139 = scmp.ne.s32.totalorder %s122, %s138
      %p140 = scmp.eq.s32.totalorder %s22, 0
      %p141 = por %p139, %p140
      %p142 = scmp.le.s32.totalorder 1, %s16
      %p143 = scmp.lt.s32.totalorder %s16, 5
      %p144 = pnand %p142, %p143
      %p145 = pneg %p144
      // Predicated region
      $region9: #{tpu_custom_call.1} parent=5 // pred_check
        _
      $region10: #{tpu_custom_call.1} parent=5 // pred_check_branch
        %147 = sbr.rel (%p144) target = $region12
      $region11: #{tpu_custom_call.1} parent=5 // pred_region
        %s148 = ssub.s32 %s16, 1
        // Predicated region
        $region13: #{tpu_custom_call.1} parent=11 // pred_check
          %p149 = pneg %p54
        $region14: #{tpu_custom_call.1} parent=11 // pred_check_branch
          %151 = sbr.rel (%p149) target = $region16
        $region15: #{tpu_custom_call.1} parent=11 // pred_region
          %s152 = smul.u32 2, %s25
          %154 = vsyncadd [#allocation3], 0
          %s155 = smul.addr %s152, 4
          %s156 = scalar_lea.hbm %s0, %s155
          %s157 = sshll.u32 %s156, 4
          %s158 = int_to_ptr.hbm [resolvable:$true] %s157
          %s159 = sshll.u32 [#allocation2], 4
          %s160 = int_to_ptr.vmem [resolvable:$true] %s159
          %165 = dma.hbm_to_vmem [thread:$0]  %s158, 128, %s160, [#allocation3], 64, 64, 4
        $region16: #{tpu_custom_call.1} parent=11 // pred_fallthru
          _
      $region12: #{tpu_custom_call.1} parent=5 // pred_fallthru
        _
      %p166 = scmp.lt.s32.totalorder %s16, 4
      // Predicated region
      $region17: #{tpu_custom_call.1} parent=5 // pred_check
        %p167 = pneg %p166
      $region18: #{tpu_custom_call.1} parent=5 // pred_check_branch
        %169 = sbr.rel (%p167) target = $region20
      $region19: #{tpu_custom_call.1} parent=5 // pred_region
        // Predicated region
        $region21: #{tpu_custom_call.1} parent=19 // pred_check
          %p170 = pneg %p74
        $region22: #{tpu_custom_call.1} parent=19 // pred_check_branch
          %172 = sbr.rel (%p170) target = $region24
        $region23: #{tpu_custom_call.1} parent=19 // pred_region
          %s173 = sand.u32 %s16, 1
          %s174 = scalar_lea.sflag [#allocation6], %s173
          %s175 = sand.u32 %s64, 1
          %s176 = smul.addr %s175, 8
          %s177 = scalar_lea.vmem [#allocation5], %s176
          %179 = vsyncadd %s174, 0
          %s180 = smul.addr %s24, 2
          %s181 = smul.addr %s180, 4
          %s182 = scalar_lea.hbm %s1, %s181
          %s183 = sshll.u32 %s182, 4
          %s184 = int_to_ptr.hbm [resolvable:$true] %s183
          %s185 = sshll.u32 %s177, 4
          %s186 = int_to_ptr.vmem [resolvable:$true] %s185
          %191 = dma.hbm_to_vmem [thread:$0]  %s184, 128, %s186, %s174, 64, 64, 4
        $region24: #{tpu_custom_call.1} parent=19 // pred_fallthru
          _
        // Predicated region
        $region25: #{tpu_custom_call.1} parent=19 // pred_check
          %p192 = pneg %p100
        $region26: #{tpu_custom_call.1} parent=19 // pred_check_branch
          %194 = sbr.rel (%p192) target = $region28
        $region27: #{tpu_custom_call.1} parent=19 // pred_region
          %s195 = sand.u32 %s16, 1
          %s196 = scalar_lea.sflag [#allocation6], %s195
          %s197 = sand.u32 %s90, 1
          %s198 = scalar_lea.vmem [#allocation7], %s197
          %200 = vsyncadd %s196, 0
          %s201 = scalar_lea.hbm %s2, %s24
          %s203 = sshll.u32 %s201, 4
          %s204 = int_to_ptr.hbm [resolvable:$true] %s203
          %s205 = sshll.u32 %s198, 4
          %s206 = int_to_ptr.vmem [resolvable:$true] %s205
          %208 = dma.hbm_to_vmem [thread:$0]  %s204, 16, %s206, %s196
        $region28: #{tpu_custom_call.1} parent=19 // pred_fallthru
          _
      $region20: #{tpu_custom_call.1} parent=5 // pred_fallthru
        _
      %p209 = scmp.le.s32.totalorder 1, %s16
      %p210 = scmp.lt.s32.totalorder %s16, 5
      %p211 = pnand %p209, %p210
      %p212 = pneg %p211
      // Predicated region
      $region29: #{tpu_custom_call.1} parent=5 // pred_check
        _
      $region30: #{tpu_custom_call.1} parent=5 // pred_check_branch
        %214 = sbr.rel (%p211) target = $region32
      $region31: #{tpu_custom_call.1} parent=5 // pred_region
        %s215 = ssub.s32 %s16, 1
        // Predicated region
        $region33: #{tpu_custom_call.1} parent=31 // pred_check
          %p216 = pneg %p54
        $region34: #{tpu_custom_call.1} parent=31 // pred_check_branch
          %218 = sbr.rel (%p216) target = $region36
        $region35: #{tpu_custom_call.1} parent=31 // pred_region
          %220 = dma.done [#allocation3], 128
        $region36: #{tpu_custom_call.1} parent=31 // pred_fallthru
          _
        %s221 = sand.u32 %s21, 1
        %s222 = scalar_lea.sflag [#allocation6], %s221
        %s223 = sand.u32 %s67, 1
        %s224 = smul.addr %s223, 8
        %s225 = scalar_lea.vmem [#allocation5], %s224
        // Predicated region
        $region37: #{tpu_custom_call.1} parent=31 // pred_check
          %p226 = pneg %p80
        $region38: #{tpu_custom_call.1} parent=31 // pred_check_branch
          %228 = sbr.rel (%p226) target = $region40
        $region39: #{tpu_custom_call.1} parent=31 // pred_region
          %230 = dma.done %s222, 128
        $region40: #{tpu_custom_call.1} parent=31 // pred_fallthru
          _
        %s231 = sand.u32 %s21, 1
        %s232 = scalar_lea.sflag [#allocation6], %s231
        %s233 = sand.u32 %s93, 1
        %s234 = scalar_lea.vmem [#allocation7], %s233
        // Predicated region
        $region41: #{tpu_custom_call.1} parent=31 // pred_check
          %p235 = pneg %p106
        $region42: #{tpu_custom_call.1} parent=31 // pred_check_branch
          %237 = sbr.rel (%p235) target = $region44
        $region43: #{tpu_custom_call.1} parent=31 // pred_region
          %239 = dma.done %s232, 16
        $region44: #{tpu_custom_call.1} parent=31 // pred_fallthru
          _
        %p240 = pneg %p54
        %p241 = pneg %p51
        %s242 = sand.u32 %s21, 1
        %s243 = scalar_lea.sflag [#allocation6], %s242
        %s244 = sand.u32 %s67, 1
        %s245 = smul.addr %s244, 8
        %s246 = scalar_lea.vmem [#allocation5], %s245
        %p247 = pneg %p80
        %p248 = pneg %p77
        %s249 = sand.u32 %s21, 1
        %s250 = scalar_lea.sflag [#allocation6], %s249
        %s251 = sand.u32 %s93, 1
        %s252 = scalar_lea.vmem [#allocation7], %s251
        %p253 = pneg %p106
        %p254 = pneg %p103
        %p255 = pneg %p134
        %p256 = pneg %p131
        %s257 = sand.u32 %s121, 1
        %s258 = scalar_lea.sflag [#allocation4], %s257
        %s259 = sand.u32 %s121, 1
        %s260 = smul.addr %s259, 8
        %s261 = scalar_lea.vmem [#allocation8], %s260
        %s262 = smul.u32 2, %s25
        %s263 = smul.u32 2, %s25
        %v265 = vld [vmem:[#allocation2] sm:$0xf]
        %v266 = vld [vmem:[#allocation2 + $0x4] sm:$0xf]
        %v267 = vld [vmem:[%s225] sm:$0xf]
        %v268 = vld [vmem:[%s225 + $0x4] sm:$0xf]
        %v269 = vld [vmem:[%s234] sm:$0x1]
        %v271 = vperm.slane %v269, 0
        %v275 = vunpack.c.l.b16 %v265
        %v276 = vunpack.c.l.b16 %v266
        %v277 = vpack.c.b16 %v276, %v275
        %v280 = vunpack.c.l.b16 %v267
        %v281 = vunpack.c.l.b16 %v268
        %v282 = vpack.c.b16 %v281, %v280
        %vm284 = vcmask 130048
        %v286 = vsel %vm284, %v277, 0
        %288 = vmatpush.bf16.msra.mxu0 0
        %289 = vmatpush.bf16.msra.mxu0 0
        %290 = vmatpush.bf16.msra.mxu0 0
        %291 = vmatpush.bf16.msra.mxu0 0
        %292 = vmatpush.bf16.msra.mxu0 0
        %293 = vmatpush.bf16.msra.mxu0 0
        %294 = vmatpush.bf16.msra.mxu0 0
        %295 = vmatpush.bf16.msra.mxu0 %v282
        %296 = vmatmul.bf16.gmra.mxu0 %v286
        %v297 = vpop.f32.mrf.mxu0
        %v298 = vadd.f32 %v271, %v297
        %v299 = vpop.f32.mrf.mxu0
        %v300 = vadd.f32 %v271, %v299
        %301 = vdwg.mxu0
        %v302 = vpack.c.bf16 %v298, %v298
        %v303 = vpack.c.bf16 %v300, %v300
        %vm304 = vcmask 257024
        %305 = vst.msk [vmem:[%s261] sm:$0xf] %vm304, %v302
        %306 = vst.msk [vmem:[%s261 + $0x4] sm:$0xf] %vm304, %v303
        %s307 = sand.u32 %s121, 1
        %s308 = scalar_lea.sflag [#allocation4], %s307
        %s309 = sand.u32 %s121, 1
        %s310 = smul.addr %s309, 8
        %s311 = scalar_lea.vmem [#allocation8], %s310
        // Predicated region
        $region45: #{tpu_custom_call.1} parent=31 // pred_check
          %p312 = pneg %p131
        $region46: #{tpu_custom_call.1} parent=31 // pred_check_branch
          %314 = sbr.rel (%p312) target = $region48
        $region47: #{tpu_custom_call.1} parent=31 // pred_region
          %s315 = smul.u32 2, %s25
          %317 = vsyncadd %s308, 0
          %s318 = smul.addr %s26, 2
          %s319 = sadd.s32 %s315, %s318
          %s320 = smul.addr %s319, 4
          %s321 = scalar_lea.hbm %s3, %s320
          %s322 = sshll.u32 %s311, 4
          %s323 = int_to_ptr.vmem [resolvable:$true] %s322
          %s324 = sshll.u32 %s321, 4
          %s325 = int_to_ptr.hbm [resolvable:$true] %s324
          %330 = dma.vmem_to_hbm [thread:$0]  %s323, 128, %s325, %s308, 64, 64, 4
        $region48: #{tpu_custom_call.1} parent=31 // pred_fallthru
          _
      $region32: #{tpu_custom_call.1} parent=5 // pred_fallthru
        _
      %p331 = scmp.le.s32.totalorder 2, %s16
      // Predicated region
      $region49: #{tpu_custom_call.1} parent=5 // pred_check
        %p332 = pneg %p331
      $region50: #{tpu_custom_call.1} parent=5 // pred_check_branch
        %334 = sbr.rel (%p332) target = $region52
      $region51: #{tpu_custom_call.1} parent=5 // pred_region
        %s335 = ssub.s32 %s16, 2
        // Predicated region
        $region53: #{tpu_custom_call.1} parent=51 // pred_check
          %p336 = pneg %p137
        $region54: #{tpu_custom_call.1} parent=51 // pred_check_branch
          %338 = sbr.rel (%p336) target = $region56
        $region55: #{tpu_custom_call.1} parent=51 // pred_region
          %s339 = sand.u32 %s122, 1
          %s340 = scalar_lea.sflag [#allocation4], %s339
          %s341 = sand.u32 %s122, 1
          %s342 = smul.addr %s341, 8
          %s343 = scalar_lea.vmem [#allocation8], %s342
          %345 = dma.done %s340, 128
        $region56: #{tpu_custom_call.1} parent=51 // pred_fallthru
          _
      $region52: #{tpu_custom_call.1} parent=5 // pred_fallthru
        _
    $region6: #{tpu_custom_call.1} parent=1 // loop_footer
      %s20 = sadd.s32 1, %s16
    $region7: #{tpu_custom_call.1} parent=1 // loop_footer_branch
      %15 = sbr.rel target = $region3
    $region8: #{tpu_custom_call.1} parent=1 // loop_exit
      _
    %346 = vsyncpa [#allocation3], 1
    %s347 = scalar_lea.sflag [#allocation3], 1
    %348 = vsyncpa %s347, 1
    %349 = vsyncpa [#allocation6], 1
    %s350 = scalar_lea.sflag [#allocation6], 1
    %351 = vsyncpa %s350, 1
    %352 = vsyncpa [#allocation4], 1
    %s353 = scalar_lea.sflag [#allocation4], 1
    %354 = vsyncpa %s353, 1

</llo_original>
